<compile_context>
chip_gen: v7x
topology: tpu7x:2x2x1
jax: 0.10.0
libtpu: 0.0.40
codegen_flags: <defaults>
</compile_context>

<pallas_src>
import jax
import jax.numpy as jnp
from jax.experimental import pallas as pl
from jax.experimental.pallas import tpu as pltpu


def class_encoder_kernel(x_ref, w_ref, b_ref, o_ref):
    # Linear: y = x @ W^T + b.  W is pre-packed (transposed once) as (C, L) bf16.
    x_bf = x_ref[...].astype(jnp.bfloat16)  # no-op if the caller already feeds bf16
    y = jnp.dot(x_bf, w_ref[...], preferred_element_type=jnp.float32)
    y = y + b_ref[...]  # (1, L) f32 bias broadcasts over batch rows

    # F.normalize(y, p=2, dim=1, eps=1e-12): y / clamp_min(||y||_2, 1e-12)
    ssq = jnp.sum(y * y, axis=-1, keepdims=True)
    inv = jax.lax.rsqrt(jnp.maximum(ssq, 1e-24))  # clamp sum-of-squares at eps^2
    o_ref[...] = (y * inv).astype(o_ref.dtype)


def prepare_class_encoder_params(weight, bias):
    """One-time parameter prep (do at init, not per call).

    weight: (latent, num_classes) f32 -> (num_classes, latent) bf16  (no K padding)
    bias:   (latent,) f32             -> (1, latent) f32
    """
    L, C = weight.shape
    w_t = weight.T.astype(jnp.bfloat16)            # transpose + cast happens ONCE
    b2d = bias.reshape(1, L).astype(jnp.float32)
    return w_t, b2d


def _pick_block_rows(B: int, max_rows: int = 1024) -> int:
    """Batch tile size: big tiles (512-1024) to amortize per-step overhead, but
    capped near ceil(B/2) so grid >= 2 steps (megacore sharding on v7x)."""
    if B <= 8:
        return B                      # single block; block dim == full dim is legal
    half = pl.cdiv(B, 2)
    return min(max_rows, ((half + 7) // 8) * 8)   # multiple of 8 for (8,128) tiling


def class_encoder(x, w_t, b2d, out_dtype=jnp.float32):
    """x: (B, num_classes) f32 or bf16; w_t: (C, L) bf16; b2d: (1, L) f32."""
    B, C = x.shape
    C_w, L = w_t.shape
    assert C == C_w, (C, C_w)

    tm = _pick_block_rows(B)
    grid_b = pl.cdiv(B, tm)

    return pl.pallas_call(
        class_encoder_kernel,
        out_shape=jax.ShapeDtypeStruct((B, L), out_dtype),
        grid_spec=pltpu.PrefetchScalarGridSpec(
            num_scalar_prefetch=0,
            grid=(grid_b,),
            in_specs=[
                pl.BlockSpec((tm, C), lambda i: (i, 0)),   # x tile (last dim == full C)
                pl.BlockSpec((C, L), lambda i: (0, 0)),    # weight, VMEM-resident
                pl.BlockSpec((1, L), lambda i: (0, 0)),    # bias
            ],
            out_specs=pl.BlockSpec((tm, L), lambda i: (i, 0)),
        ),
        compiler_params=pltpu.CompilerParams(
            dimension_semantics=("parallel",),
        ),
    )(x, w_t, b2d)


if __name__ == "__main__":
    num_classes = 345
    latent_size = 128
    batch = 20  # deliberately NOT a multiple of the tile -> exercises the cdiv grid
                # with a masked trailing partial block (safe: no cross-row reduction)

    key = jax.random.PRNGKey(0)
    kx, kw, kb = jax.random.split(key, 3)

    # Deterministic synthetic parameters (shapes from nn.Linear(345, 128)).
    weight = jax.random.normal(kw, (latent_size, num_classes), dtype=jnp.float32) * 0.05
    bias = jax.random.normal(kb, (latent_size,), dtype=jnp.float32) * 0.05

    # Example input: dense class scores, (B, num_classes), f32 (module parity).
    x = jax.random.normal(kx, (batch, num_classes), dtype=jnp.float32)

    # One-time weight prep (transpose + bf16 cast, no padding, not per call).
    w_t, b2d = prepare_class_encoder_params(weight, bias)

    encoder = jax.jit(class_encoder)
    out = jax.block_until_ready(encoder(x, w_t, b2d))

    # Pure-JAX f32 reference (Linear + L2 normalize over dim 1, eps=1e-12).
    y_ref = x @ weight.T + bias
    ref = y_ref / jnp.maximum(jnp.linalg.norm(y_ref, axis=1, keepdims=True), 1e-12)
    assert out.shape == (batch, latent_size)
    # Tolerance loosened for the bf16 weight/activation matmul (f32 accumulate).
    assert jnp.allclose(out, ref, atol=1e-2, rtol=1e-2), float(jnp.max(jnp.abs(out - ref)))

    # bf16 activations are accepted directly (halves the dominant HBM read when the
    # upstream producer already emits bf16); in-kernel cast is then a no-op.
    out_bf = jax.block_until_ready(encoder(x.astype(jnp.bfloat16), w_t, b2d))
    assert jnp.allclose(out_bf, ref, atol=3e-2, rtol=3e-2)

    print("KERNEL_OK")
</pallas_src>

<mosaic_0001>
module attributes {stable_mosaic.version = 11 : i64} {
  func.func @class_encoder_kernel(%arg0: i32, %arg1: memref<16x345xf32, #tpu.memory_space<vmem>>, %arg2: memref<345x128xbf16, #tpu.memory_space<vmem>>, %arg3: memref<1x128xf32, #tpu.memory_space<vmem>>, %arg4: memref<16x128xf32, #tpu.memory_space<vmem>>) attributes {dimension_semantics = [#tpu.dimension_semantics<parallel>], iteration_bounds = array<i64: 2>, scalar_prefetch = 0 : i64, scratch_operands = 0 : i64, tpu.core_type = #tpu.core_type<tc>, window_params = [{transform_indices = @transform_0, window_bounds = array<i64: 16, 345>}, {pipeline_mode = #tpu.pipeline_mode<synchronous>, transform_indices = @transform_1, window_bounds = array<i64: 345, 128>}, {pipeline_mode = #tpu.pipeline_mode<synchronous>, transform_indices = @transform_2, window_bounds = array<i64: 1, 128>}, {transform_indices = @transform_3, window_bounds = array<i64: 16, 128>}]} {
    %c0 = arith.constant 0 : index
    %c0_0 = arith.constant 0 : index
    %0 = vector.load %arg1[%c0, %c0_0] : memref<16x345xf32, #tpu.memory_space<vmem>>, vector<16x345xf32>
    %1 = arith.truncf %0 : vector<16x345xf32> to vector<16x345xbf16>
    %c0_1 = arith.constant 0 : index
    %c0_2 = arith.constant 0 : index
    %2 = vector.load %arg2[%c0_1, %c0_2] : memref<345x128xbf16, #tpu.memory_space<vmem>>, vector<345x128xbf16>
    %cst = arith.constant dense<0.000000e+00> : vector<16x128xf32>
    %3 = tpu.matmul %1, %2, %cst {dimension_numbers = #tpu.dot_dimension_numbers<[1], [0], [0], [1], [0, 0, 1, 1], [], []>} : vector<16x345xbf16>, vector<345x128xbf16>, vector<16x128xf32> -> vector<16x128xf32>
    %c0_3 = arith.constant 0 : index
    %c0_4 = arith.constant 0 : index
    %4 = vector.load %arg3[%c0_3, %c0_4] : memref<1x128xf32, #tpu.memory_space<vmem>>, vector<1x128xf32>
    %5 = vector.broadcast %4 : vector<1x128xf32> to vector<16x128xf32>
    %6 = arith.addf %3, %5 : vector<16x128xf32>
    %7 = arith.mulf %6, %6 : vector<16x128xf32>
    %cst_5 = arith.constant dense<0.000000e+00> : vector<16xf32>
    %8 = vector.multi_reduction <add>, %7, %cst_5 [1] : vector<16x128xf32> to vector<16xf32>
    %9 = vector.shape_cast %8 : vector<16xf32> to vector<16x1xf32>
    %cst_6 = arith.constant 1.000000e-24 : f32
    %10 = vector.broadcast %cst_6 : f32 to vector<16x1xf32>
    %11 = arith.maximumf %9, %10 : vector<16x1xf32>
    %12 = math.rsqrt %11 : vector<16x1xf32>
    %13 = vector.broadcast %12 : vector<16x1xf32> to vector<16x128xf32>
    %14 = arith.mulf %6, %13 : vector<16x128xf32>
    %c0_7 = arith.constant 0 : index
    %c0_8 = arith.constant 0 : index
    %15 = vector.load %arg4[%c0_7, %c0_8] : memref<16x128xf32, #tpu.memory_space<vmem>>, vector<16x128xf32>
    tpu.vector_store %arg4[%c0_7, %c0_8], %14 {strides = array<i32>} : memref<16x128xf32, #tpu.memory_space<vmem>>, vector<16x128xf32>,
    return
  }
  func.func @transform_0(%arg0: i32) -> (i32, i32) {
    %c0_i32 = arith.constant 0 : i32
    %c0_i32_0 = arith.constant 0 : i32
    return %arg0, %c0_i32 : i32, i32
  }
  func.func @transform_1(%arg0: i32) -> (i32, i32) {
    %c0_i32 = arith.constant 0 : i32
    %c0_i32_0 = arith.constant 0 : i32
    %c0_i32_1 = arith.constant 0 : i32
    return %c0_i32, %c0_i32_0 : i32, i32
  }
  func.func @transform_2(%arg0: i32) -> (i32, i32) {
    %c0_i32 = arith.constant 0 : i32
    %c0_i32_0 = arith.constant 0 : i32
    %c0_i32_1 = arith.constant 0 : i32
    return %c0_i32, %c0_i32_0 : i32, i32
  }
  func.func @transform_3(%arg0: i32) -> (i32, i32) {
    %c0_i32 = arith.constant 0 : i32
    %c0_i32_0 = arith.constant 0 : i32
    return %arg0, %c0_i32 : i32, i32
  }
}

</mosaic_0001>

<llo_original>
// kernel: class_encoder.1
$region0: #{class_encoder.1}
  #allocation0 [shape = 'u32[]', space=smem, size = 0x4, offset = 0x4, fixed_abs, tag = 'smem constant byte address 0x4 - core index']
  #allocation1 [shape = 'u32[144,128]{1,0:T(1,128)}', space=vmem, size = 0x12000, scoped, tag = 'internal scratch']
  %s0 = inlined_call_operand.hbm [shape: f32[20,345], index: 0, kind: input, shape index: {}]
  %s1 = inlined_call_operand.hbm [shape: bf16[345,128], index: 1, kind: input, shape index: {}]
  %s2 = inlined_call_operand.vmem [shape: f32[1,128], index: 2, kind: input, shape index: {}]
  %s3 = inlined_call_operand.hbm [shape: f32[20,128], index: 3, kind: output, shape index: {}]
  %s4 = sld [smem:[#allocation0]]
  $region53: #{class_encoder.1} parent=0
    _
  %s6 = ssub.s32 1, %s4
  %s7 = scalar_select 0, %s6, %s4
  $region1: #{class_encoder.1} parent=0
    #allocation2 [shape = 'u8[49152]{0}', space=vmem, size = 0xc000, scoped, tag = 'input window, operand 0']
    #allocation3 [shape = 's32[2]{0}', space=sflag, size = 0x8, scoped, tag = 'scoped memory for class_encoder.1']
    #allocation4 [shape = 's32[2]{0}', space=sflag, size = 0x8, scoped, tag = 'scoped memory for class_encoder.1']
    #allocation5 [shape = 'u8[90112]{0}', space=vmem, size = 0x16000, scoped, tag = 'input window, operand 1, single buffered']
    #allocation6 [shape = 's32[1]{0}', space=sflag, size = 0x4, scoped, tag = 'scoped memory for class_encoder.1']
    #allocation7 [shape = 'u8[16384]{0}', space=vmem, size = 0x4000, scoped, tag = 'output window, operand 0']
    %8 = vsyncpa [#allocation3], 0
    %s9 = scalar_lea.sflag [#allocation3], 1
    %10 = vsyncpa %s9, 0
    %11 = vsyncpa [#allocation6], 0
    %12 = vsyncpa [#allocation4], 0
    %s13 = scalar_lea.sflag [#allocation4], 1
    %14 = vsyncpa %s13, 0
    loop: start=0, step=1, limit=4
    $region2: #{class_encoder.1} parent=1 // loop_pre_header
      _
    $region3: #{class_encoder.1} parent=1 // loop_header
      %s16 = sphi 0, %s20
      %p17 = scmp.ge.s32.totalorder %s16, 4
      %s26 = sphi 0, %s28
      %s29 = sphi 0, %s26
      %s30 = sphi 0, %s29
      %s46 = sphi 0, %s30
      %s50 = sphi 0, %s50
      %s52 = sphi 0, %s50
      %s53 = sphi 0, %s52
      %s67 = sphi 0, %s53
      %s71 = sphi 0, %s71
      %s73 = sphi 0, %s71
      %s74 = sphi 0, %s73
      %s88 = sphi 0, %s74
      %s94 = sphi 0, %s96
      %s97 = sphi 0, %s94
      %s98 = sphi 0, %s97
      %s114 = sphi 0, %s98
    $region4: #{class_encoder.1} parent=1 // loop_header_branch
      %19 = sbr.rel (%p17) target = $region8
    $region5: #{class_encoder.1} parent=1 // loop_body
      %s21 = ssub.s32 %s16, 1
      %s22 = ssub.s32 %s16, 2
      %s23 = sadd.s32 %s16, 1
      %s24 = ssub.s32 %s16, %s23
      %p25 = scmp.eq.s32.totalorder %s24, 0
      %s27 = sadd.s32 %s26, 1
      %s28 = scalar_select %p25, %s26, %s27
      %p31 = pneg %p25
      %p32 = scmp.eq.s32.totalorder %s16, 1
      %p33 = por %p31, %p32
      %p34 = scmp.ne.s32.totalorder %s26, %s29
      %p35 = scmp.eq.s32.totalorder %s16, 0
      %p36 = por %p34, %p35
      %p37 = scmp.ne.s32.totalorder %s26, %s29
      %p38 = scmp.eq.s32.totalorder %s21, 1
      %p39 = por %p37, %p38
      %p40 = scmp.ne.s32.totalorder %s29, %s30
      %p41 = scmp.eq.s32.totalorder %s21, 0
      %p42 = por %p40, %p41
      %p43 = scmp.ne.s32.totalorder %s29, %s30
      %p44 = scmp.eq.s32.totalorder %s22, 1
      %p45 = por %p43, %p44
      %p47 = scmp.ne.s32.totalorder %s30, %s46
      %p48 = scmp.eq.s32.totalorder %s22, 0
      %p49 = por %p47, %p48
      %s51 = sadd.s32 %s50, 1
      %p54 = scmp.eq.s32.totalorder %s16, 1
      %p55 = scmp.ne.s32.totalorder %s50, %s52
      %p56 = scmp.eq.s32.totalorder %s16, 0
      %p57 = por %p55, %p56
      %p58 = scmp.ne.s32.totalorder %s50, %s52
      %p59 = scmp.eq.s32.totalorder %s21, 1
      %p60 = por %p58, %p59
      %p61 = scmp.ne.s32.totalorder %s52, %s53
      %p62 = scmp.eq.s32.totalorder %s21, 0
      %p63 = por %p61, %p62
      %p64 = scmp.ne.s32.totalorder %s52, %s53
      %p65 = scmp.eq.s32.totalorder %s22, 1
      %p66 = por %p64, %p65
      %p68 = scmp.ne.s32.totalorder %s53, %s67
      %p69 = scmp.eq.s32.totalorder %s22, 0
      %p70 = por %p68, %p69
      %s72 = sadd.s32 %s71, 1
      %p75 = scmp.eq.s32.totalorder %s16, 1
      %p76 = scmp.ne.s32.totalorder %s71, %s73
      %p77 = scmp.eq.s32.totalorder %s16, 0
      %p78 = por %p76, %p77
      %p79 = scmp.ne.s32.totalorder %s71, %s73
      %p80 = scmp.eq.s32.totalorder %s21, 1
      %p81 = por %p79, %p80
      %p82 = scmp.ne.s32.totalorder %s73, %s74
      %p83 = scmp.eq.s32.totalorder %s21, 0
      %p84 = por %p82, %p83
      %p85 = scmp.ne.s32.totalorder %s73, %s74
      %p86 = scmp.eq.s32.totalorder %s22, 1
      %p87 = por %p85, %p86
      %p89 = scmp.ne.s32.totalorder %s74, %s88
      %p90 = scmp.eq.s32.totalorder %s22, 0
      %p91 = por %p89, %p90
      %s92 = ssub.s32 %s16, %s23
      %p93 = scmp.eq.s32.totalorder %s92, 0
      %s95 = sadd.s32 %s94, 1
      %s96 = scalar_select %p93, %s94, %s95
      %p99 = pneg %p93
      %p100 = scmp.eq.s32.totalorder %s16, 1
      %p101 = por %p99, %p100
      %p102 = scmp.ne.s32.totalorder %s94, %s97
      %p103 = scmp.eq.s32.totalorder %s16, 0
      %p104 = por %p102, %p103
      %p105 = scmp.ne.s32.totalorder %s94, %s97
      %p106 = scmp.eq.s32.totalorder %s21, 1
      %p107 = por %p105, %p106
      %p108 = scmp.ne.s32.totalorder %s97, %s98
      %p109 = scmp.eq.s32.totalorder %s21, 0
      %p110 = por %p108, %p109
      %p111 = scmp.ne.s32.totalorder %s97, %s98
      %p112 = scmp.eq.s32.totalorder %s22, 1
      %p113 = por %p111, %p112
      %p115 = scmp.ne.s32.totalorder %s98, %s114
      %p116 = scmp.eq.s32.totalorder %s22, 0
      %p117 = por %p115, %p116
      %p118 = scmp.le.s32.totalorder 1, %s16
      %p119 = scmp.lt.s32.totalorder %s16, 3
      %p120 = pnand %p118, %p119
      %p121 = pneg %p120
      // Predicated region
      $region9: #{class_encoder.1} parent=5 // pred_check
        _
      $region10: #{class_encoder.1} parent=5 // pred_check_branch
        %123 = sbr.rel (%p120) target = $region12
      $region11: #{class_encoder.1} parent=5 // pred_region
        %s124 = ssub.s32 %s16, 1
        // Predicated region
        $region13: #{class_encoder.1} parent=11 // pred_check
          %p125 = pneg %p63
        $region14: #{class_encoder.1} parent=11 // pred_check_branch
          %127 = sbr.rel (%p125) target = $region16
        $region15: #{class_encoder.1} parent=11 // pred_region
          %s129 = ssub.s32 2816, 2816
          %130 = vsyncadd [#allocation6], %s129
          %s131 = sshll.u32 [#allocation5], 4
          %s132 = int_to_ptr.vmem [resolvable:$true] %s131
          %137 = dma.hbm_to_vmem [thread:$0]  %s1, 2816, %s132, [#allocation6], 64, 64, 4
        $region16: #{class_encoder.1} parent=11 // pred_fallthru
          _
        // Predicated region
        $region17: #{class_encoder.1} parent=11 // pred_check
          %p138 = pneg %p84
        $region18: #{class_encoder.1} parent=11 // pred_check_branch
          %140 = sbr.rel (%p138) target = $region20
        $region19: #{class_encoder.1} parent=11 // pred_region
          _
        $region20: #{class_encoder.1} parent=11 // pred_fallthru
          _
      $region12: #{class_encoder.1} parent=5 // pred_fallthru
        _
      %p141 = scmp.lt.s32.totalorder %s16, 2
      // Predicated region
      $region21: #{class_encoder.1} parent=5 // pred_check
        %p142 = pneg %p141
      $region22: #{class_encoder.1} parent=5 // pred_check_branch
        %144 = sbr.rel (%p142) target = $region24
      $region23: #{class_encoder.1} parent=5 // pred_region
        // Predicated region
        $region25: #{class_encoder.1} parent=23 // pred_check
          %p145 = pneg %p36
        $region26: #{class_encoder.1} parent=23 // pred_check_branch
          %147 = sbr.rel (%p145) target = $region28
        $region27: #{class_encoder.1} parent=23 // pred_region
          %s148 = sand.u32 %s26, 1
          %s149 = scalar_lea.sflag [#allocation3], %s148
          %s150 = sand.u32 %s26, 1
          %s151 = smul.addr %s150, 48
          %s152 = scalar_lea.vmem [#allocation2], %s151
          %s153 = smul.u32 2, %s16
          %s154 = ssub.s32 3, %s153
          %p155 = scmp.lt.s32.totalorder %s154, 2
          %s156 = scalar_select %p155, %s154, 2
          %s157 = smul.u32 128, %s156
          %s158 = smul.u32 %s157, 3
          %s160 = ssub.s32 768, %s158
          %161 = vsyncadd %s149, %s160
          %p162 = scmp.ne.s32.totalorder 0, %s158
          %s163 = smul.addr %s153, 3
          %s164 = smul.addr %s163, 128
          %s165 = scalar_lea.hbm %s0, %s164
          %s166 = smul.u32 24, %s156
          %s167 = sshll.u32 %s152, 4
          %s168 = int_to_ptr.vmem [resolvable:$true] %s167
          %s169 = sshll.u32 %s166, 4
          %173 = dma.hbm_to_vmem [thread:$0]  (%p162), %s165, %s169, %s168, %s149, 384, 384, 24
        $region28: #{class_encoder.1} parent=23 // pred_fallthru
          _
      $region24: #{class_encoder.1} parent=5 // pred_fallthru
        _
      %p174 = scmp.le.s32.totalorder 1, %s16
      %p175 = scmp.lt.s32.totalorder %s16, 3
      %p176 = pnand %p174, %p175
      %p177 = pneg %p176
      // Predicated region
      $region29: #{class_encoder.1} parent=5 // pred_check
        _
      $region30: #{class_encoder.1} parent=5 // pred_check_branch
        %179 = sbr.rel (%p176) target = $region32
      $region31: #{class_encoder.1} parent=5 // pred_region
        %s180 = ssub.s32 %s16, 1
        %s181 = sand.u32 %s29, 1
        %s182 = scalar_lea.sflag [#allocation3], %s181
        %s183 = sand.u32 %s29, 1
        %s184 = smul.addr %s183, 48
        %s185 = scalar_lea.vmem [#allocation2], %s184
        // Predicated region
        $region33: #{class_encoder.1} parent=31 // pred_check
          %p186 = pneg %p42
        $region34: #{class_encoder.1} parent=31 // pred_check_branch
          %188 = sbr.rel (%p186) target = $region36
        $region35: #{class_encoder.1} parent=31 // pred_region
          %189 = dma.done %s182, 768
        $region36: #{class_encoder.1} parent=31 // pred_fallthru
          _
        // Predicated region
        $region37: #{class_encoder.1} parent=31 // pred_check
          %p190 = pneg %p63
        $region38: #{class_encoder.1} parent=31 // pred_check_branch
          %192 = sbr.rel (%p190) target = $region40
        $region39: #{class_encoder.1} parent=31 // pred_region
          %193 = dma.done [#allocation6], 2816
        $region40: #{class_encoder.1} parent=31 // pred_fallthru
          _
        %s194 = sand.u32 %s29, 1
        %s195 = scalar_lea.sflag [#allocation3], %s194
        %s196 = sand.u32 %s29, 1
        %s197 = smul.addr %s196, 48
        %s198 = scalar_lea.vmem [#allocation2], %s197
        %p199 = pneg %p42
        %p200 = pneg %p39
        %p201 = pneg %p63
        %p202 = pneg %p60
        %p203 = pneg %p84
        %p204 = pneg %p81
        %p205 = pneg %p110
        %p206 = pneg %p107
        %s207 = sand.u32 %s97, 1
        %s208 = scalar_lea.sflag [#allocation4], %s207
        %s209 = sand.u32 %s97, 1
        %s210 = smul.addr %s209, 16
        %s211 = scalar_lea.vmem [#allocation7], %s210
        %s212 = smul.u32 2, %s21
        %s213 = ssub.s32 3, %s212
        %p214 = scmp.lt.s32.totalorder %s213, 2
        %s215 = scalar_select %p214, %s213, 2
        %s216 = smul.u32 128, %s215
        %s217 = smul.u32 %s216, 3
        %s218 = smul.u32 2, %s21
        %s219 = ssub.s32 3, %s218
        %p220 = scmp.lt.s32.totalorder %s219, 2
        %s221 = scalar_select %p220, %s219, 2
        %s222 = smul.u32 128, %s221
        %v224 = vld [vmem:[%s185] sm:$0xff]
        %v225 = vld [vmem:[%s185 + $0x8] sm:$0xff]
        %v226 = vld [vmem:[%s185 + $0x10] sm:$0xff]
        %v227 = vld [vmem:[%s185 + $0x18] sm:$0xff]
        %v228 = vld [vmem:[%s185 + $0x20] sm:$0xff]
        %v229 = vld [vmem:[%s185 + $0x28] sm:$0xff]
        %v230 = vpack.c.bf16 %v227, %v224
        %v231 = vpack.c.bf16 %v228, %v225
        %v232 = vpack.c.bf16 %v229, %v226
        %v233 = vld [vmem:[#allocation5] sm:$0xf]
        %v234 = vld [vmem:[#allocation5 + $0x4] sm:$0xf]
        %v235 = vld [vmem:[#allocation5 + $0x8] sm:$0xf]
        %v236 = vld [vmem:[#allocation5 + $0xc] sm:$0xf]
        %v237 = vld [vmem:[#allocation5 + $0x10] sm:$0xf]
        %v238 = vld [vmem:[#allocation5 + $0x14] sm:$0xf]
        %v239 = vld [vmem:[#allocation5 + $0x18] sm:$0xf]
        %v240 = vld [vmem:[#allocation5 + $0x1c] sm:$0xf]
        %v241 = vld [vmem:[#allocation5 + $0x20] sm:$0xf]
        %v242 = vld [vmem:[#allocation5 + $0x24] sm:$0xf]
        %v243 = vld [vmem:[#allocation5 + $0x28] sm:$0xf]
        %v244 = vld [vmem:[#allocation5 + $0x2c] sm:$0xf]
        %v245 = vld [vmem:[#allocation5 + $0x30] sm:$0xf]
        %v246 = vld [vmem:[#allocation5 + $0x34] sm:$0xf]
        %v247 = vld [vmem:[#allocation5 + $0x38] sm:$0xf]
        %v248 = vld [vmem:[#allocation5 + $0x3c] sm:$0xf]
        %v249 = vld [vmem:[#allocation5 + $0x40] sm:$0xf]
        %v250 = vld [vmem:[#allocation5 + $0x44] sm:$0xf]
        %v251 = vld [vmem:[#allocation5 + $0x48] sm:$0xf]
        %v252 = vld [vmem:[#allocation5 + $0x4c] sm:$0xf]
        %v253 = vld [vmem:[#allocation5 + $0x50] sm:$0xf]
        %v254 = vld [vmem:[#allocation5 + $0x54] sm:$0xf]
        %v255 = vld [vmem:[#allocation5 + $0x58] sm:$0xf]
        %v256 = vld [vmem:[#allocation5 + $0x5c] sm:$0xf]
        %v257 = vld [vmem:[#allocation5 + $0x60] sm:$0xf]
        %v258 = vld [vmem:[#allocation5 + $0x64] sm:$0xf]
        %v259 = vld [vmem:[#allocation5 + $0x68] sm:$0xf]
        %v260 = vld [vmem:[#allocation5 + $0x6c] sm:$0xf]
        %v261 = vld [vmem:[#allocation5 + $0x70] sm:$0xf]
        %v262 = vld [vmem:[#allocation5 + $0x74] sm:$0xf]
        %v263 = vld [vmem:[#allocation5 + $0x78] sm:$0xf]
        %v264 = vld [vmem:[#allocation5 + $0x7c] sm:$0xf]
        %v265 = vld [vmem:[#allocation5 + $0x80] sm:$0xf]
        %v266 = vld [vmem:[#allocation5 + $0x84] sm:$0xf]
        %v267 = vld [vmem:[#allocation5 + $0x88] sm:$0xf]
        %v268 = vld [vmem:[#allocation5 + $0x8c] sm:$0xf]
        %v269 = vld [vmem:[#allocation5 + $0x90] sm:$0xf]
        %v270 = vld [vmem:[#allocation5 + $0x94] sm:$0xf]
        %v271 = vld [vmem:[#allocation5 + $0x98] sm:$0xf]
        %v272 = vld [vmem:[#allocation5 + $0x9c] sm:$0xf]
        %v273 = vld [vmem:[#allocation5 + $0xa0] sm:$0xf]
        %v274 = vld [vmem:[#allocation5 + $0xa4] sm:$0xf]
        %v275 = vld [vmem:[#allocation5 + $0xa8] sm:$0xf]
        %v276 = vld [vmem:[#allocation5 + $0xac] sm:$0x1]
        %v277 = vld [vmem:[%s2] sm:$0x1]
        %v279 = vlaneseq
        %v280 = vshrl.u32 %v279, 7
        %v281 = vsub.s32 0, %v280
        %v282 = vrot.slane %v277, %v281
        %v328 = vunpack.c.l.b16 %v233
        %v329 = vunpack.c.l.b16 %v234
        %v330 = vunpack.c.l.b16 %v235
        %v331 = vunpack.c.l.b16 %v236
        %v332 = vunpack.c.l.b16 %v237
        %v333 = vunpack.c.l.b16 %v238
        %v334 = vunpack.c.l.b16 %v239
        %v335 = vunpack.c.l.b16 %v240
        %v336 = vunpack.c.l.b16 %v241
        %v337 = vunpack.c.l.b16 %v242
        %v338 = vunpack.c.l.b16 %v243
        %v339 = vunpack.c.l.b16 %v244
        %v340 = vunpack.c.l.b16 %v245
        %v341 = vunpack.c.l.b16 %v246
        %v342 = vunpack.c.l.b16 %v247
        %v343 = vunpack.c.l.b16 %v248
        %v344 = vunpack.c.l.b16 %v249
        %v345 = vunpack.c.l.b16 %v250
        %v346 = vunpack.c.l.b16 %v251
        %v347 = vunpack.c.l.b16 %v252
        %v348 = vunpack.c.l.b16 %v253
        %v349 = vunpack.c.l.b16 %v254
        %v350 = vunpack.c.l.b16 %v255
        %v351 = vunpack.c.l.b16 %v256
        %v352 = vunpack.c.l.b16 %v257
        %v353 = vunpack.c.l.b16 %v258
        %v354 = vunpack.c.l.b16 %v259
        %v355 = vunpack.c.l.b16 %v260
        %v356 = vunpack.c.l.b16 %v261
        %v357 = vunpack.c.l.b16 %v262
        %v358 = vunpack.c.l.b16 %v263
        %v359 = vunpack.c.l.b16 %v264
        %v360 = vunpack.c.l.b16 %v265
        %v361 = vunpack.c.l.b16 %v266
        %v362 = vunpack.c.l.b16 %v267
        %v363 = vunpack.c.l.b16 %v268
        %v364 = vunpack.c.l.b16 %v269
        %v365 = vunpack.c.l.b16 %v270
        %v366 = vunpack.c.l.b16 %v271
        %v367 = vunpack.c.l.b16 %v272
        %v368 = vunpack.c.l.b16 %v273
        %v369 = vunpack.c.l.b16 %v274
        %v370 = vunpack.c.l.b16 %v275
        %v371 = vunpack.c.l.b16 %v276
        %v372 = vpack.c.b16 %v329, %v328
        %v373 = vpack.c.b16 %v331, %v330
        %v374 = vpack.c.b16 %v333, %v332
        %v375 = vpack.c.b16 %v335, %v334
        %v376 = vpack.c.b16 %v337, %v336
        %v377 = vpack.c.b16 %v339, %v338
        %v378 = vpack.c.b16 %v341, %v340
        %v379 = vpack.c.b16 %v343, %v342
        %v380 = vpack.c.b16 %v345, %v344
        %v381 = vpack.c.b16 %v347, %v346
        %v382 = vpack.c.b16 %v349, %v348
        %v383 = vpack.c.b16 %v351, %v350
        %v384 = vpack.c.b16 %v353, %v352
        %v385 = vpack.c.b16 %v355, %v354
        %v386 = vpack.c.b16 %v357, %v356
        %v387 = vpack.c.b16 %v359, %v358
        %v388 = vpack.c.b16 %v361, %v360
        %v389 = vpack.c.b16 %v363, %v362
        %v390 = vpack.c.b16 %v365, %v364
        %v391 = vpack.c.b16 %v367, %v366
        %v392 = vpack.c.b16 %v369, %v368
        %v393 = vpack.c.b16 %v371, %v370
        %vm415 = vcmask 728064
        %v417 = vsel %vm415, %v232, 0
        %vm419 = vcmask 1043456
        %vm420 = vcmask 1044480
        %v421 = vsel %vm419, 4294967295, 65535
        %v422 = vsel %vm420, %v421, 0
        %v424 = vand.u32 %v393, %v422
        %426 = vmatprep.subr.bf16.mxu0 0
        %427 = vmatpush1.bf16.msra.mxu0 %v372
        %428 = vmatprep.subr.bf16.mxu0 0
        %429 = vmatpush1.bf16.msra.mxu0 %v373
        %430 = vmatprep.subr.bf16.mxu0 0
        %431 = vmatpush1.bf16.msra.mxu0 %v374
        %432 = vmatprep.subr.bf16.mxu0 0
        %433 = vmatpush1.bf16.msra.mxu0 %v375
        %434 = vmatprep.subr.bf16.mxu0 0
        %435 = vmatpush1.bf16.msra.mxu0 %v376
        %436 = vmatprep.subr.bf16.mxu0 0
        %437 = vmatpush1.bf16.msra.mxu0 %v377
        %438 = vmatprep.subr.bf16.mxu0 0
        %439 = vmatpush1.bf16.msra.mxu0 %v378
        %440 = vmatprep.subr.bf16.mxu0 0
        %441 = vmatpush1.bf16.msra.mxu0 %v379
        %442 = vmatprep.subr.bf16.mxu0 0
        %443 = vmatpush1.bf16.msra.mxu0 %v380
        %444 = vmatprep.subr.bf16.mxu0 0
        %445 = vmatpush1.bf16.msra.mxu0 %v381
        %446 = vmatprep.subr.bf16.mxu0 0
        %447 = vmatpush1.bf16.msra.mxu0 %v382
        %448 = vmatprep.subr.bf16.mxu0 0
        %449 = vmatpush1.bf16.msra.mxu0 %v383
        %450 = vmatprep.subr.bf16.mxu0 0
        %451 = vmatpush1.bf16.msra.mxu0 %v384
        %452 = vmatprep.subr.bf16.mxu0 0
        %453 = vmatpush1.bf16.msra.mxu0 %v385
        %454 = vmatprep.subr.bf16.mxu0 0
        %455 = vmatpush1.bf16.msra.mxu0 %v386
        %456 = vmatprep.subr.bf16.mxu0 0
        %457 = vmatpush1.bf16.msra.mxu0 %v387
        %458 = vmatprep.mubr.bf16.mxu0 %v231
        %459 = vmatmul.mubr.bf16.gmra.mrb[0].mxu0 %v230
        %v460 = vpop.f32.mrb[0].mxu0
        %v461 = vadd.f32 %v282, %v460
        %v462 = vpop.f32.mrb[0].mxu0
        %v463 = vpop.f32.mrb[0].mxu0
        %v464 = vadd.f32 %v282, %v463
        %v465 = vpop.f32.mrb[0].mxu0
        %466 = vdwg.mxu0
        %467 = vmatprep.subr.bf16.mxu0 0
        %468 = vmatpush1.bf16.msra.mxu0 %v388
        %469 = vmatprep.subr.bf16.mxu0 0
        %470 = vmatpush1.bf16.msra.mxu0 %v389
        %471 = vmatprep.subr.bf16.mxu0 0
        %472 = vmatpush1.bf16.msra.mxu0 %v390
        %473 = vmatprep.subr.bf16.mxu0 0
        %474 = vmatpush1.bf16.msra.mxu0 %v391
        %475 = vmatprep.subr.bf16.mxu0 0
        %476 = vmatpush1.bf16.msra.mxu0 %v392
        %477 = vmatprep.subr.bf16.mxu0 0
        %478 = vmatpush1.bf16.msra.mxu0 %v424
        %479 = vmatprep.subr.bf16.mxu0 0
        %480 = vmatpush1.bf16.msra.mxu0 0
        %481 = vmatprep.subr.bf16.mxu0 0
        %482 = vmatpush1.bf16.msra.mxu0 0
        %483 = vmatprep.subr.bf16.mxu0 0
        %484 = vmatpush1.bf16.msra.mxu0 0
        %485 = vmatprep.subr.bf16.mxu0 0
        %486 = vmatpush1.bf16.msra.mxu0 0
        %487 = vmatprep.subr.bf16.mxu0 0
        %488 = vmatpush1.bf16.msra.mxu0 0
        %489 = vmatprep.subr.bf16.mxu0 0
        %490 = vmatpush1.bf16.msra.mxu0 0
        %491 = vmatprep.subr.bf16.mxu0 0
        %492 = vmatpush1.bf16.msra.mxu0 0
        %493 = vmatprep.subr.bf16.mxu0 0
        %494 = vmatpush1.bf16.msra.mxu0 0
        %495 = vmatprep.subr.bf16.mxu0 0
        %496 = vmatpush1.bf16.msra.mxu0 0
        %497 = vmatprep.subr.bf16.mxu0 0
        %498 = vmatpush1.bf16.msra.mxu0 0
        %499 = vmatprep.mubr.bf16.mxu0 0
        %500 = vmatmul.mubr.bf16.gmra.mrb[0].mxu0 %v417
        %v501 = vpop.f32.mrb[0].mxu0
        %v502 = vadd.f32 %v461, %v501
        %v503 = vpop.f32.mrb[0].mxu0
        %v504 = vpop.f32.mrb[0].mxu0
        %v505 = vadd.f32 %v464, %v504
        %v506 = vpop.f32.mrb[0].mxu0
        %507 = vdwg.mxu0
        %v508 = vmul.f32 %v502, %v502
        %v509 = vmul.f32 %v505, %v505
        %510 = vadd.xlane.f32.xlu0 %v508
        %v511 = vpop.xlane.xlu0 %510
        %512 = vadd.xlane.f32.xlu0 %v509
        %v513 = vpop.xlane.xlu0 %512
        %v514 = vmax.f32 %v511, 1e-24
        %v515 = vmax.f32 %v513, 1e-24
        %v516 = vrsqrt.pop %v514
        %v517 = vrsqrt.pop %v515
        %v518 = vmul.f32 %v502, %v516
        %v519 = vmul.f32 %v505, %v517
        %520 = vst [vmem:[%s211] sm:$0xff] %v518
        %521 = vst [vmem:[%s211 + $0x8] sm:$0xff] %v519
        %s522 = sand.u32 %s97, 1
        %s523 = scalar_lea.sflag [#allocation4], %s522
        %s524 = sand.u32 %s97, 1
        %s525 = smul.addr %s524, 16
        %s526 = scalar_lea.vmem [#allocation7], %s525
        // Predicated region
        $region41: #{class_encoder.1} parent=31 // pred_check
          %p527 = pneg %p107
        $region42: #{class_encoder.1} parent=31 // pred_check_branch
          %529 = sbr.rel (%p527) target = $region44
        $region43: #{class_encoder.1} parent=31 // pred_region
          %s530 = smul.u32 2, %s21
          %s531 = ssub.s32 3, %s530
          %p532 = scmp.lt.s32.totalorder %s531, 2
          %s533 = scalar_select %p532, %s531, 2
          %s534 = smul.u32 128, %s533
          %s536 = ssub.s32 256, %s534
          %537 = vsyncadd %s523, %s536
          %p538 = scmp.ne.s32.totalorder 0, %s534
          %s539 = smul.addr %s530, 128
          %s540 = scalar_lea.hbm %s3, %s539
          %s541 = smul.u32 8, %s533
          %s542 = sshll.u32 %s526, 4
          %s543 = int_to_ptr.vmem [resolvable:$true] %s542
          %s544 = sshll.u32 %s541, 4
          %548 = dma.vmem_to_hbm [thread:$0]  (%p538), %s543, %s544, %s540, %s523, 128, 128, 8
        $region44: #{class_encoder.1} parent=31 // pred_fallthru
          _
      $region32: #{class_encoder.1} parent=5 // pred_fallthru
        _
      %p549 = scmp.le.s32.totalorder 2, %s16
      // Predicated region
      $region45: #{class_encoder.1} parent=5 // pred_check
        %p550 = pneg %p549
      $region46: #{class_encoder.1} parent=5 // pred_check_branch
        %552 = sbr.rel (%p550) target = $region48
      $region47: #{class_encoder.1} parent=5 // pred_region
        %s553 = ssub.s32 %s16, 2
        // Predicated region
        $region49: #{class_encoder.1} parent=47 // pred_check
          %p554 = pneg %p113
        $region50: #{class_encoder.1} parent=47 // pred_check_branch
          %556 = sbr.rel (%p554) target = $region52
        $region51: #{class_encoder.1} parent=47 // pred_region
          %s557 = sand.u32 %s98, 1
          %s558 = scalar_lea.sflag [#allocation4], %s557
          %s559 = sand.u32 %s98, 1
          %s560 = smul.addr %s559, 16
          %s561 = scalar_lea.vmem [#allocation7], %s560
          %562 = dma.done %s558, 256
        $region52: #{class_encoder.1} parent=47 // pred_fallthru
          _
      $region48: #{class_encoder.1} parent=5 // pred_fallthru
        _
    $region6: #{class_encoder.1} parent=1 // loop_footer
      %s20 = sadd.s32 1, %s16
    $region7: #{class_encoder.1} parent=1 // loop_footer_branch
      %15 = sbr.rel target = $region3
    $region8: #{class_encoder.1} parent=1 // loop_exit
      _
    %563 = vsyncpa [#allocation3], 1
    %s564 = scalar_lea.sflag [#allocation3], 1
    %565 = vsyncpa %s564, 1
    %566 = vsyncpa [#allocation6], 1
    %567 = vsyncpa [#allocation4], 1
    %s568 = scalar_lea.sflag [#allocation4], 1
    %569 = vsyncpa %s568, 1

</llo_original>
